<compile_context>
chip_gen: v6e
topology: v6e:2x2x1
jax: 0.10.0
libtpu: 0.0.40
codegen_flags: <defaults>
</compile_context>

<pallas_src>
import functools
import math

import numpy as np

import jax
import jax.numpy as jnp
from jax.experimental import pallas as pl
from jax.experimental.pallas import tpu as pltpu

_LANES = 128
_TARGET_BLOCK_BYTES = 4 * 1024 * 1024      # ~4 MiB output per grid step (safe on v7x)
_MAX_PACK_LANES = 2048                      # cap on lcm(dim, 128) for the packed path
_VMEM_LIMIT_BYTES = 32 * 1024 * 1024


def _round_up(x: int, m: int) -> int:
    return ((x + m - 1) // m) * m


# -----------------------------------------------------------------------------
# Host-side constant tables (numpy, lru-cached as device constants).
# -----------------------------------------------------------------------------
@functools.lru_cache(maxsize=None)
def _host_tables(dim: int):
    half = dim // 2
    scale = math.log(10000.0) / (half - 1)
    freqs = np.exp(-scale * np.arange(half, dtype=np.float64)).astype(np.float32)
    freq_full = np.concatenate([freqs, freqs])                                  # (dim,)
    phase = np.concatenate([np.zeros(half, np.float32),
                            np.full(half, math.pi / 2.0, np.float32)])          # (dim,)
    return freq_full, phase


@functools.lru_cache(maxsize=None)
def _simple_device_tables(dim: int):
    freq_full, phase = _host_tables(dim)
    return jnp.asarray(freq_full[None, :]), jnp.asarray(phase[None, :])


@functools.lru_cache(maxsize=None)
def _packed_device_tables(dim: int):
    freq_full, phase = _host_tables(dim)
    lanes = math.lcm(dim, _LANES)
    k = lanes // dim
    w = np.zeros((k, lanes), np.float32)
    for i in range(k):
        w[i, i * dim:(i + 1) * dim] = freq_full
    ph = np.tile(phase, k)[None, :]                                              # (1, lanes)
    return k, lanes, jnp.asarray(w), jnp.asarray(ph)


# -----------------------------------------------------------------------------
# Kernels
# -----------------------------------------------------------------------------
def _pos_emb_kernel_packed(x_ref, w_ref, ph_ref, o_ref):
    """Lane-dense packed variant: each output row holds k consecutive timesteps.

    x_ref : (TM, k)     f32 timesteps (k consecutive timesteps per packed row)
    w_ref : (k, lanes)  f32: w[i, i*dim:(i+1)*dim] = [freqs | freqs], else 0
    ph_ref: (1, lanes)  f32 phase ([0..0 | pi/2..pi/2] tiled k times)
    o_ref : (TM, lanes) row-major identical to (TM*k, dim)
    """
    x = x_ref[...] * 1000.0                                  # (TM, k) f32
    # Build the sin argument on the MXU (idle otherwise).  Operands stay f32 at
    # HIGHEST precision: args reach ~1000 rad, bf16 operands would be useless.
    arg = jax.lax.dot_general(
        x, w_ref[...],
        dimension_numbers=(((1,), (0,)), ((), ())),
        precision=jax.lax.Precision.HIGHEST,
        preferred_element_type=jnp.float32,
    )                                                        # (TM, lanes)
    o_ref[...] = jnp.sin(arg + ph_ref[...]).astype(o_ref.dtype)


def _pos_emb_kernel_simple(x_ref, fr_ref, ph_ref, o_ref):
    """Plain variant (dim already a multiple of 128, or lcm packing too large).

    x_ref : (TM, 1)   f32 timesteps
    fr_ref: (1, dim)  f32 [freqs | freqs]
    ph_ref: (1, dim)  f32 [0 ... 0 | pi/2 ... pi/2]
    o_ref : (TM, dim)
    """
    x = x_ref[...] * 1000.0
    o_ref[...] = jnp.sin(x * fr_ref[...] + ph_ref[...]).astype(o_ref.dtype)


# -----------------------------------------------------------------------------
# Tile selection: byte-budgeted, >= 2 grid steps when there is enough work.
# -----------------------------------------------------------------------------
def _pick_tm(rows: int, lane_width: int, out_itemsize: int) -> int:
    bytes_per_row = lane_width * out_itemsize
    tm = max(8, (_TARGET_BLOCK_BYTES // bytes_per_row) // 8 * 8)
    if rows >= 16:
        # Keep at least 2 grid steps so "parallel" shards across v7x's 2 TCs.
        tm = min(tm, _round_up(pl.cdiv(rows, 2), 8))
    if tm >= rows:
        tm = rows            # single block equal to the full array dims
    return tm


# -----------------------------------------------------------------------------
# Wrapper
# -----------------------------------------------------------------------------
def sinusoidal_pos_emb(x: jax.Array, dim: int, *, out_dtype=jnp.float32,
                       force_pallas: bool = False) -> jax.Array:
    """Equivalent of SinusoidalPosEmb(dim)(x). Returns (N, dim) embeddings."""
    assert dim % 2 == 0 and dim >= 4, "dim must be even and >= 4"
    x = jnp.squeeze(x)
    if x.ndim == 0:          # N == 1 input shaped (1, 1): squeeze gives a scalar
        x = x.reshape(1)
    assert x.ndim == 1, "expected 1-D timesteps after squeeze"
    n = int(x.shape[0])
    x = x.astype(jnp.float32)
    out_itemsize = jnp.dtype(out_dtype).itemsize

    # Tiny problems: a single fused XLA op beats pallas dispatch overhead.
    if not force_pallas and n * dim <= 2048:
        fr, ph = _simple_device_tables(dim)
        return jnp.sin((x[:, None] * 1000.0) * fr + ph).astype(out_dtype)

    compiler_params = pltpu.CompilerParams(
        dimension_semantics=("parallel",),
        vmem_limit_bytes=_VMEM_LIMIT_BYTES,
    )

    packed = (dim % _LANES != 0) and (math.lcm(dim, _LANES) <= _MAX_PACK_LANES)

    if packed:
        k, lanes, w, ph = _packed_device_tables(dim)
        rows = pl.cdiv(n, k)
        if rows < 8:                     # keep sublane/MXU shapes sane for tiny N
            rows = 8
        padded_n = rows * k
        x2 = (x if padded_n == n else jnp.pad(x, (0, padded_n - n))).reshape(rows, k)
        tm = _pick_tm(rows, lanes, out_itemsize)
        ce = pl.CostEstimate(
            flops=2 * rows * k * lanes + 2 * rows * lanes,
            transcendentals=rows * lanes,
            bytes_accessed=rows * k * 4 + (k + 1) * lanes * 4
                           + rows * lanes * out_itemsize,
        )
        out = pl.pallas_call(
            _pos_emb_kernel_packed,
            out_shape=jax.ShapeDtypeStruct((rows, lanes), out_dtype),
            grid=(pl.cdiv(rows, tm),),
            in_specs=[
                pl.BlockSpec((tm, k), lambda i: (i, 0)),
                pl.BlockSpec((k, lanes), lambda i: (0, 0)),     # constant block
                pl.BlockSpec((1, lanes), lambda i: (0, 0)),     # constant block
            ],
            out_specs=pl.BlockSpec((tm, lanes), lambda i: (i, 0)),
            compiler_params=compiler_params,
            cost_estimate=ce,
        )(x2, w, ph)
        # Row-major bytes of (rows, lanes) == (rows*k, dim): reshape is free.
        out = out.reshape(padded_n, dim)
        return out if padded_n == n else out[:n]

    # Simple path: dim is a multiple of 128 (already lane-dense) or lcm too big.
    fr, ph = _simple_device_tables(dim)
    tm = _pick_tm(n, dim, out_itemsize)
    ce = pl.CostEstimate(
        flops=3 * n * dim,
        transcendentals=n * dim,
        bytes_accessed=n * 4 + 2 * dim * 4 + n * dim * out_itemsize,
    )
    out = pl.pallas_call(
        _pos_emb_kernel_simple,
        out_shape=jax.ShapeDtypeStruct((n, dim), out_dtype),
        grid=(pl.cdiv(n, tm),),
        in_specs=[
            pl.BlockSpec((tm, 1), lambda i: (i, 0)),
            pl.BlockSpec((1, dim), lambda i: (0, 0)),           # constant block
            pl.BlockSpec((1, dim), lambda i: (0, 0)),           # constant block
        ],
        out_specs=pl.BlockSpec((tm, dim), lambda i: (i, 0)),
        compiler_params=compiler_params,
        cost_estimate=ce,
    )(x.reshape(n, 1), fr, ph)
    return out


# -----------------------------------------------------------------------------
# Pure-JAX reference mirroring the PyTorch module exactly.
# -----------------------------------------------------------------------------
def _reference(x: jax.Array, dim: int) -> jax.Array:
    x = jnp.squeeze(x).astype(jnp.float32)
    if x.ndim == 0:
        x = x.reshape(1)
    x = x * 1000.0
    half = dim // 2
    scale = math.log(10000.0) / (half - 1)
    freqs = jnp.exp(jnp.arange(half, dtype=jnp.float32) * -scale)
    emb = x[:, None] * freqs[None, :]
    return jnp.concatenate([jnp.sin(emb), jnp.cos(emb)], axis=-1)


if __name__ == "__main__":
    k0, k1, k2, k3 = jax.random.split(jax.random.PRNGKey(0), 4)

    # Small shape matching the diffusion caller: (batch, 1) timesteps in [0, 1).
    batch, dim = 8, 32
    t_small = jax.random.uniform(k0, (batch, 1), dtype=jnp.float32)
    out_small = jax.block_until_ready(
        sinusoidal_pos_emb(t_small, dim, force_pallas=True))
    ref_small = _reference(t_small, dim)
    assert out_small.shape == (batch, dim), out_small.shape
    # sin(a + pi/2) vs cos(a) at args up to ~1000 rad: allow a few 1e-4 slack.
    assert jnp.max(jnp.abs(out_small - ref_small)) < 2e-3, "small-case mismatch"

    # Larger N, dim=32: packed lane-dense path, >= 2 grid steps, ragged last block.
    t_big = jax.random.uniform(k1, (2053,), dtype=jnp.float32)
    out_big = jax.block_until_ready(sinusoidal_pos_emb(t_big, 32))
    assert out_big.shape == (2053, 32)
    assert jnp.max(jnp.abs(out_big - _reference(t_big, 32))) < 2e-3, "packed mismatch"

    # dim=96 (does not divide 128): generalized lcm packing (384 lanes, k=4).
    t_mid = jax.random.uniform(k2, (517,), dtype=jnp.float32)
    out_mid = jax.block_until_ready(sinusoidal_pos_emb(t_mid, 96))
    assert out_mid.shape == (517, 96)
    assert jnp.max(jnp.abs(out_mid - _reference(t_mid, 96))) < 2e-3, "lcm-packed mismatch"

    # dim=128: simple (already lane-dense) path with a ragged last block.
    t_wide = jax.random.uniform(k3, (1030,), dtype=jnp.float32)
    out_wide = jax.block_until_ready(sinusoidal_pos_emb(t_wide, 128))
    assert out_wide.shape == (1030, 128)
    assert jnp.max(jnp.abs(out_wide - _reference(t_wide, 128))) < 2e-3, "simple mismatch"

    print("KERNEL_OK")
</pallas_src>

<mosaic_0001>
module attributes {stable_mosaic.version = 11 : i64} {
  func.func @_pos_emb_kernel_packed(%arg0: i32, %arg1: memref<8x4xf32, #tpu.memory_space<vmem>>, %arg2: memref<4x128xf32, #tpu.memory_space<vmem>>, %arg3: memref<1x128xf32, #tpu.memory_space<vmem>>, %arg4: memref<8x128xf32, #tpu.memory_space<vmem>>) attributes {dimension_semantics = [#tpu.dimension_semantics<parallel>], iteration_bounds = array<i64: 1>, scalar_prefetch = 0 : i64, scratch_operands = 0 : i64, tpu.core_type = #tpu.core_type<tc>, window_params = [{transform_indices = @transform_0, window_bounds = array<i64: 8, 4>}, {pipeline_mode = #tpu.pipeline_mode<synchronous>, transform_indices = @transform_1, window_bounds = array<i64: 4, 128>}, {pipeline_mode = #tpu.pipeline_mode<synchronous>, transform_indices = @transform_2, window_bounds = array<i64: 1, 128>}, {transform_indices = @transform_3, window_bounds = array<i64: 8, 128>}]} {
    %c0 = arith.constant 0 : index
    %c0_0 = arith.constant 0 : index
    %0 = vector.load %arg1[%c0, %c0_0] : memref<8x4xf32, #tpu.memory_space<vmem>>, vector<8x4xf32>
    %cst = arith.constant 1.000000e+03 : f32
    %1 = vector.broadcast %cst : f32 to vector<8x4xf32>
    %2 = arith.mulf %0, %1 : vector<8x4xf32>
    %c0_1 = arith.constant 0 : index
    %c0_2 = arith.constant 0 : index
    %3 = vector.load %arg2[%c0_1, %c0_2] : memref<4x128xf32, #tpu.memory_space<vmem>>, vector<4x128xf32>
    %cst_3 = arith.constant dense<0.000000e+00> : vector<8x128xf32>
    %4 = tpu.matmul %2, %3, %cst_3 {dimension_numbers = #tpu.dot_dimension_numbers<[1], [0], [0], [1], [0, 0, 1, 1], [], []>, precision = #tpu.contract_precision<fp32>} : vector<8x4xf32>, vector<4x128xf32>, vector<8x128xf32> -> vector<8x128xf32>
    %c0_4 = arith.constant 0 : index
    %c0_5 = arith.constant 0 : index
    %5 = vector.load %arg3[%c0_4, %c0_5] : memref<1x128xf32, #tpu.memory_space<vmem>>, vector<1x128xf32>
    %6 = vector.broadcast %5 : vector<1x128xf32> to vector<8x128xf32>
    %7 = arith.addf %4, %6 : vector<8x128xf32>
    %8 = math.sin %7 : vector<8x128xf32>
    %c0_6 = arith.constant 0 : index
    %c0_7 = arith.constant 0 : index
    %9 = vector.load %arg4[%c0_6, %c0_7] : memref<8x128xf32, #tpu.memory_space<vmem>>, vector<8x128xf32>
    tpu.vector_store %arg4[%c0_6, %c0_7], %8 {strides = array<i32>} : memref<8x128xf32, #tpu.memory_space<vmem>>, vector<8x128xf32>,
    return
  }
  func.func @transform_0(%arg0: i32) -> (i32, i32) {
    %c0_i32 = arith.constant 0 : i32
    %c0_i32_0 = arith.constant 0 : i32
    return %arg0, %c0_i32 : i32, i32
  }
  func.func @transform_1(%arg0: i32) -> (i32, i32) {
    %c0_i32 = arith.constant 0 : i32
    %c0_i32_0 = arith.constant 0 : i32
    %c0_i32_1 = arith.constant 0 : i32
    return %c0_i32, %c0_i32_0 : i32, i32
  }
  func.func @transform_2(%arg0: i32) -> (i32, i32) {
    %c0_i32 = arith.constant 0 : i32
    %c0_i32_0 = arith.constant 0 : i32
    %c0_i32_1 = arith.constant 0 : i32
    return %c0_i32, %c0_i32_0 : i32, i32
  }
  func.func @transform_3(%arg0: i32) -> (i32, i32) {
    %c0_i32 = arith.constant 0 : i32
    %c0_i32_0 = arith.constant 0 : i32
    return %arg0, %c0_i32 : i32, i32
  }
}

</mosaic_0001>

<llo_original>
// kernel: tpu_custom_call.1
$region0: #{tpu_custom_call.1}
  #allocation0 [shape = 'u32[]', space=smem, size = 0x4, offset = 0x4, fixed_abs, tag = 'smem constant byte address 0x4 - core index']
  #allocation1 [shape = 'u32[144,128]{1,0:T(1,128)}', space=vmem, size = 0x12000, scoped, tag = 'internal scratch']
  %s0 = inlined_call_operand.vmem [shape: f32[8,4], index: 0, kind: input, shape index: {}]
  %s1 = inlined_call_operand.vmem [shape: f32[4,128], index: 1, kind: input, shape index: {}]
  %s2 = inlined_call_operand.vmem [shape: f32[1,128], index: 2, kind: input, shape index: {}]
  %s3 = inlined_call_operand.hbm [shape: f32[8,128], index: 3, kind: output, shape index: {}]
  %s4 = sld [smem:[#allocation0]]
  $region22: #{tpu_custom_call.1} parent=0
    _
  %s6 = ssub.s32 1, %s4
  %s7 = scalar_select 0, %s6, %s4
  $region1: #{tpu_custom_call.1} parent=0
    #allocation2 [shape = 'u8[4096]{0}', space=vmem, size = 0x1000, scoped, tag = 'output window, operand 0, single buffered']
    #allocation3 [shape = 's32[1]{0}', space=sflag, size = 0x4, scoped, tag = 'scoped memory for tpu_custom_call.1']
    %8 = vsyncpa [#allocation3], 0
    // Predicated region
    $region2: #{tpu_custom_call.1} parent=1 // pred_check
      _
    $region3: #{tpu_custom_call.1} parent=1 // pred_check_branch
      %10 = sbr.rel (0) target = $region5
    $region4: #{tpu_custom_call.1} parent=1 // pred_region
      _
    $region5: #{tpu_custom_call.1} parent=1 // pred_fallthru
      _
    // Predicated region
    $region6: #{tpu_custom_call.1} parent=1 // pred_check
      _
    $region7: #{tpu_custom_call.1} parent=1 // pred_check_branch
      %12 = sbr.rel (0) target = $region9
    $region8: #{tpu_custom_call.1} parent=1 // pred_region
      _
    $region9: #{tpu_custom_call.1} parent=1 // pred_fallthru
      _
    // Predicated region
    $region10: #{tpu_custom_call.1} parent=1 // pred_check
      _
    $region11: #{tpu_custom_call.1} parent=1 // pred_check_branch
      %14 = sbr.rel (0) target = $region13
    $region12: #{tpu_custom_call.1} parent=1 // pred_region
      _
    $region13: #{tpu_custom_call.1} parent=1 // pred_fallthru
      _
    %v15 = vld [vmem:[%s0] sm:$0xff]
    %v16 = vmul.f32 %v15, 1000.0
    %v17 = vld [vmem:[%s1] sm:$0xf]
    %v18 = vld [vmem:[%s2] sm:$0x1]
    %v20 = vlaneseq
    %v21 = vshrl.u32 %v20, 7
    %v22 = vsub.s32 0, %v21
    %v23 = vrot.slane %v18, %v22
    %vm25 = vcmask 31744
    %v27 = vsel %vm25, %v16, 0
    %vm29 = vcmask 1043456
    %v31 = vsel %vm29, %v17, 0
    %33 = vmatprep.subr.mxu0 0.0
    %34 = vmatpush1.msra.mxu0 0.0
    %35 = vmatprep.subr.mxu0 0.0
    %36 = vmatpush1.msra.mxu0 0.0
    %37 = vmatprep.subr.mxu0 0.0
    %38 = vmatpush1.msra.mxu0 0.0
    %39 = vmatprep.subr.mxu0 0.0
    %40 = vmatpush1.msra.mxu0 0.0
    %41 = vmatprep.subr.mxu0 0.0
    %42 = vmatpush1.msra.mxu0 0.0
    %43 = vmatprep.subr.mxu0 0.0
    %44 = vmatpush1.msra.mxu0 0.0
    %45 = vmatprep.subr.mxu0 0.0
    %46 = vmatpush1.msra.mxu0 0.0
    %47 = vmatprep.subr.mxu0 0.0
    %48 = vmatpush1.msra.mxu0 0.0
    %49 = vmatprep.subr.mxu0 0.0
    %50 = vmatpush1.msra.mxu0 0.0
    %51 = vmatprep.subr.mxu0 0.0
    %52 = vmatpush1.msra.mxu0 0.0
    %53 = vmatprep.subr.mxu0 0.0
    %54 = vmatpush1.msra.mxu0 0.0
    %55 = vmatprep.subr.mxu0 0.0
    %56 = vmatpush1.msra.mxu0 0.0
    %57 = vmatprep.subr.mxu0 0.0
    %58 = vmatpush1.msra.mxu0 0.0
    %59 = vmatprep.subr.mxu0 0.0
    %60 = vmatpush1.msra.mxu0 0.0
    %61 = vmatprep.subr.mxu0 0.0
    %62 = vmatpush1.msra.mxu0 0.0
    %63 = vmatprep.subr.mxu0 0.0
    %v64 = vand.u32 %v31, 4294901760
    %65 = vmatpush1.msra.mxu0 %v64
    %66 = vmatprep.subr.mxu0 0.0
    %67 = vmatpush2.msra.mxu0 0.0
    %68 = vmatprep.subr.mxu0 0.0
    %69 = vmatpush2.msra.mxu0 0.0
    %70 = vmatprep.subr.mxu0 0.0
    %71 = vmatpush2.msra.mxu0 0.0
    %72 = vmatprep.subr.mxu0 0.0
    %73 = vmatpush2.msra.mxu0 0.0
    %74 = vmatprep.subr.mxu0 0.0
    %75 = vmatpush2.msra.mxu0 0.0
    %76 = vmatprep.subr.mxu0 0.0
    %77 = vmatpush2.msra.mxu0 0.0
    %78 = vmatprep.subr.mxu0 0.0
    %79 = vmatpush2.msra.mxu0 0.0
    %80 = vmatprep.subr.mxu0 0.0
    %81 = vmatpush2.msra.mxu0 0.0
    %82 = vmatprep.subr.mxu0 0.0
    %83 = vmatpush2.msra.mxu0 0.0
    %84 = vmatprep.subr.mxu0 0.0
    %85 = vmatpush2.msra.mxu0 0.0
    %86 = vmatprep.subr.mxu0 0.0
    %87 = vmatpush2.msra.mxu0 0.0
    %88 = vmatprep.subr.mxu0 0.0
    %89 = vmatpush2.msra.mxu0 0.0
    %90 = vmatprep.subr.mxu0 0.0
    %91 = vmatpush2.msra.mxu0 0.0
    %92 = vmatprep.subr.mxu0 0.0
    %93 = vmatpush2.msra.mxu0 0.0
    %94 = vmatprep.subr.mxu0 0.0
    %95 = vmatpush2.msra.mxu0 0.0
    %96 = vmatprep.subr.mxu0 0.0
    %97 = vmatpush2.msra.mxu0 0.0
    %98 = vmatprep.mubr.f32.mxu0 0.0
    %v99 = vand.u32 %v27, 4294901760
    %v100 = vsub.f32 %v27, %v99
    %v101 = vand.u32 %v100, 4294901760
    %v102 = vsub.f32 %v100, %v101
    %v103 = vand.u32 %v102, 4294901760
    %104 = vmatmul.mubr.f32.gmra.mxu0 %v103
    %v105 = vpop.f32.mrf.mxu0
    %v106 = vadd.f32 %v23, %v105
    %v107 = vpop.f32.mrf.mxu0
    %108 = vdwg.mxu0
    %109 = vmatprep.subr.mxu0 0.0
    %110 = vmatpush1.msra.mxu0 0.0
    %111 = vmatprep.subr.mxu0 0.0
    %112 = vmatpush1.msra.mxu0 0.0
    %113 = vmatprep.subr.mxu0 0.0
    %114 = vmatpush1.msra.mxu0 0.0
    %115 = vmatprep.subr.mxu0 0.0
    %116 = vmatpush1.msra.mxu0 0.0
    %117 = vmatprep.subr.mxu0 0.0
    %118 = vmatpush1.msra.mxu0 0.0
    %119 = vmatprep.subr.mxu0 0.0
    %120 = vmatpush1.msra.mxu0 0.0
    %121 = vmatprep.subr.mxu0 0.0
    %122 = vmatpush1.msra.mxu0 0.0
    %123 = vmatprep.subr.mxu0 0.0
    %124 = vmatpush1.msra.mxu0 0.0
    %125 = vmatprep.subr.mxu0 0.0
    %126 = vmatpush1.msra.mxu0 0.0
    %127 = vmatprep.subr.mxu0 0.0
    %128 = vmatpush1.msra.mxu0 0.0
    %129 = vmatprep.subr.mxu0 0.0
    %130 = vmatpush1.msra.mxu0 0.0
    %131 = vmatprep.subr.mxu0 0.0
    %132 = vmatpush1.msra.mxu0 0.0
    %133 = vmatprep.subr.mxu0 0.0
    %134 = vmatpush1.msra.mxu0 0.0
    %135 = vmatprep.subr.mxu0 0.0
    %136 = vmatpush1.msra.mxu0 0.0
    %137 = vmatprep.subr.mxu0 0.0
    %138 = vmatpush1.msra.mxu0 0.0
    %139 = vmatprep.subr.mxu0 0.0
    %v140 = vand.u32 %v31, 4294901760
    %v141 = vsub.f32 %v31, %v140
    %v142 = vand.u32 %v141, 4294901760
    %v143 = vsub.f32 %v141, %v142
    %v144 = vand.u32 %v143, 4294901760
    %145 = vmatpush1.msra.mxu0 %v144
    %146 = vmatprep.subr.mxu0 0.0
    %147 = vmatpush2.msra.mxu0 0.0
    %148 = vmatprep.subr.mxu0 0.0
    %149 = vmatpush2.msra.mxu0 0.0
    %150 = vmatprep.subr.mxu0 0.0
    %151 = vmatpush2.msra.mxu0 0.0
    %152 = vmatprep.subr.mxu0 0.0
    %153 = vmatpush2.msra.mxu0 0.0
    %154 = vmatprep.subr.mxu0 0.0
    %155 = vmatpush2.msra.mxu0 0.0
    %156 = vmatprep.subr.mxu0 0.0
    %157 = vmatpush2.msra.mxu0 0.0
    %158 = vmatprep.subr.mxu0 0.0
    %159 = vmatpush2.msra.mxu0 0.0
    %160 = vmatprep.subr.mxu0 0.0
    %161 = vmatpush2.msra.mxu0 0.0
    %162 = vmatprep.subr.mxu0 0.0
    %163 = vmatpush2.msra.mxu0 0.0
    %164 = vmatprep.subr.mxu0 0.0
    %165 = vmatpush2.msra.mxu0 0.0
    %166 = vmatprep.subr.mxu0 0.0
    %167 = vmatpush2.msra.mxu0 0.0
    %168 = vmatprep.subr.mxu0 0.0
    %169 = vmatpush2.msra.mxu0 0.0
    %170 = vmatprep.subr.mxu0 0.0
    %171 = vmatpush2.msra.mxu0 0.0
    %172 = vmatprep.subr.mxu0 0.0
    %173 = vmatpush2.msra.mxu0 0.0
    %174 = vmatprep.subr.mxu0 0.0
    %175 = vmatpush2.msra.mxu0 0.0
    %176 = vmatprep.subr.mxu0 0.0
    %177 = vmatpush2.msra.mxu0 0.0
    %178 = vmatprep.mubr.f32.mxu0 0.0
    %v179 = vand.u32 %v27, 4294901760
    %180 = vmatmul.mubr.f32.gmra.mxu0 %v179
    %v181 = vpop.f32.mrf.mxu0
    %v182 = vadd.f32 %v106, %v181
    %v183 = vpop.f32.mrf.mxu0
    %184 = vdwg.mxu0
    %185 = vmatprep.subr.mxu0 0.0
    %186 = vmatpush1.msra.mxu0 0.0
    %187 = vmatprep.subr.mxu0 0.0
    %188 = vmatpush1.msra.mxu0 0.0
    %189 = vmatprep.subr.mxu0 0.0
    %190 = vmatpush1.msra.mxu0 0.0
    %191 = vmatprep.subr.mxu0 0.0
    %192 = vmatpush1.msra.mxu0 0.0
    %193 = vmatprep.subr.mxu0 0.0
    %194 = vmatpush1.msra.mxu0 0.0
    %195 = vmatprep.subr.mxu0 0.0
    %196 = vmatpush1.msra.mxu0 0.0
    %197 = vmatprep.subr.mxu0 0.0
    %198 = vmatpush1.msra.mxu0 0.0
    %199 = vmatprep.subr.mxu0 0.0
    %200 = vmatpush1.msra.mxu0 0.0
    %201 = vmatprep.subr.mxu0 0.0
    %202 = vmatpush1.msra.mxu0 0.0
    %203 = vmatprep.subr.mxu0 0.0
    %204 = vmatpush1.msra.mxu0 0.0
    %205 = vmatprep.subr.mxu0 0.0
    %206 = vmatpush1.msra.mxu0 0.0
    %207 = vmatprep.subr.mxu0 0.0
    %208 = vmatpush1.msra.mxu0 0.0
    %209 = vmatprep.subr.mxu0 0.0
    %210 = vmatpush1.msra.mxu0 0.0
    %211 = vmatprep.subr.mxu0 0.0
    %212 = vmatpush1.msra.mxu0 0.0
    %213 = vmatprep.subr.mxu0 0.0
    %214 = vmatpush1.msra.mxu0 0.0
    %215 = vmatprep.subr.mxu0 0.0
    %v216 = vand.u32 %v31, 4294901760
    %v217 = vsub.f32 %v31, %v216
    %218 = vmatpush1.msra.mxu0 %v217
    %219 = vmatprep.subr.mxu0 0.0
    %220 = vmatpush2.msra.mxu0 0.0
    %221 = vmatprep.subr.mxu0 0.0
    %222 = vmatpush2.msra.mxu0 0.0
    %223 = vmatprep.subr.mxu0 0.0
    %224 = vmatpush2.msra.mxu0 0.0
    %225 = vmatprep.subr.mxu0 0.0
    %226 = vmatpush2.msra.mxu0 0.0
    %227 = vmatprep.subr.mxu0 0.0
    %228 = vmatpush2.msra.mxu0 0.0
    %229 = vmatprep.subr.mxu0 0.0
    %230 = vmatpush2.msra.mxu0 0.0
    %231 = vmatprep.subr.mxu0 0.0
    %232 = vmatpush2.msra.mxu0 0.0
    %233 = vmatprep.subr.mxu0 0.0
    %234 = vmatpush2.msra.mxu0 0.0
    %235 = vmatprep.subr.mxu0 0.0
    %236 = vmatpush2.msra.mxu0 0.0
    %237 = vmatprep.subr.mxu0 0.0
    %238 = vmatpush2.msra.mxu0 0.0
    %239 = vmatprep.subr.mxu0 0.0
    %240 = vmatpush2.msra.mxu0 0.0
    %241 = vmatprep.subr.mxu0 0.0
    %242 = vmatpush2.msra.mxu0 0.0
    %243 = vmatprep.subr.mxu0 0.0
    %244 = vmatpush2.msra.mxu0 0.0
    %245 = vmatprep.subr.mxu0 0.0
    %246 = vmatpush2.msra.mxu0 0.0
    %247 = vmatprep.subr.mxu0 0.0
    %248 = vmatpush2.msra.mxu0 0.0
    %249 = vmatprep.subr.mxu0 0.0
    %250 = vmatpush2.msra.mxu0 0.0
    %251 = vmatprep.mubr.f32.mxu0 0.0
    %v252 = vand.u32 %v27, 4294901760
    %v253 = vsub.f32 %v27, %v252
    %254 = vmatmul.mubr.f32.gmra.mxu0 %v253
    %v255 = vpop.f32.mrf.mxu0
    %v256 = vadd.f32 %v182, %v255
    %v257 = vpop.f32.mrf.mxu0
    %258 = vdwg.mxu0
    %259 = vmatprep.subr.mxu0 0.0
    %260 = vmatpush1.msra.mxu0 0.0
    %261 = vmatprep.subr.mxu0 0.0
    %262 = vmatpush1.msra.mxu0 0.0
    %263 = vmatprep.subr.mxu0 0.0
    %264 = vmatpush1.msra.mxu0 0.0
    %265 = vmatprep.subr.mxu0 0.0
    %266 = vmatpush1.msra.mxu0 0.0
    %267 = vmatprep.subr.mxu0 0.0
    %268 = vmatpush1.msra.mxu0 0.0
    %269 = vmatprep.subr.mxu0 0.0
    %270 = vmatpush1.msra.mxu0 0.0
    %271 = vmatprep.subr.mxu0 0.0
    %272 = vmatpush1.msra.mxu0 0.0
    %273 = vmatprep.subr.mxu0 0.0
    %274 = vmatpush1.msra.mxu0 0.0
    %275 = vmatprep.subr.mxu0 0.0
    %276 = vmatpush1.msra.mxu0 0.0
    %277 = vmatprep.subr.mxu0 0.0
    %278 = vmatpush1.msra.mxu0 0.0
    %279 = vmatprep.subr.mxu0 0.0
    %280 = vmatpush1.msra.mxu0 0.0
    %281 = vmatprep.subr.mxu0 0.0
    %282 = vmatpush1.msra.mxu0 0.0
    %283 = vmatprep.subr.mxu0 0.0
    %284 = vmatpush1.msra.mxu0 0.0
    %285 = vmatprep.subr.mxu0 0.0
    %286 = vmatpush1.msra.mxu0 0.0
    %287 = vmatprep.subr.mxu0 0.0
    %288 = vmatpush1.msra.mxu0 0.0
    %289 = vmatprep.subr.mxu0 0.0
    %v290 = vand.u32 %v31, 4294901760
    %291 = vmatpush1.msra.mxu0 %v290
    %292 = vmatprep.subr.mxu0 0.0
    %293 = vmatpush2.msra.mxu0 0.0
    %294 = vmatprep.subr.mxu0 0.0
    %295 = vmatpush2.msra.mxu0 0.0
    %296 = vmatprep.subr.mxu0 0.0
    %297 = vmatpush2.msra.mxu0 0.0
    %298 = vmatprep.subr.mxu0 0.0
    %299 = vmatpush2.msra.mxu0 0.0
    %300 = vmatprep.subr.mxu0 0.0
    %301 = vmatpush2.msra.mxu0 0.0
    %302 = vmatprep.subr.mxu0 0.0
    %303 = vmatpush2.msra.mxu0 0.0
    %304 = vmatprep.subr.mxu0 0.0
    %305 = vmatpush2.msra.mxu0 0.0
    %306 = vmatprep.subr.mxu0 0.0
    %307 = vmatpush2.msra.mxu0 0.0
    %308 = vmatprep.subr.mxu0 0.0
    %309 = vmatpush2.msra.mxu0 0.0
    %310 = vmatprep.subr.mxu0 0.0
    %311 = vmatpush2.msra.mxu0 0.0
    %312 = vmatprep.subr.mxu0 0.0
    %313 = vmatpush2.msra.mxu0 0.0
    %314 = vmatprep.subr.mxu0 0.0
    %315 = vmatpush2.msra.mxu0 0.0
    %316 = vmatprep.subr.mxu0 0.0
    %317 = vmatpush2.msra.mxu0 0.0
    %318 = vmatprep.subr.mxu0 0.0
    %319 = vmatpush2.msra.mxu0 0.0
    %320 = vmatprep.subr.mxu0 0.0
    %321 = vmatpush2.msra.mxu0 0.0
    %322 = vmatprep.subr.mxu0 0.0
    %323 = vmatpush2.msra.mxu0 0.0
    %324 = vmatprep.mubr.f32.mxu0 0.0
    %v325 = vand.u32 %v27, 4294901760
    %v326 = vsub.f32 %v27, %v325
    %v327 = vand.u32 %v326, 4294901760
    %328 = vmatmul.mubr.f32.gmra.mxu0 %v327
    %v329 = vpop.f32.mrf.mxu0
    %v330 = vadd.f32 %v256, %v329
    %v331 = vpop.f32.mrf.mxu0
    %332 = vdwg.mxu0
    %333 = vmatprep.subr.mxu0 0.0
    %334 = vmatpush1.msra.mxu0 0.0
    %335 = vmatprep.subr.mxu0 0.0
    %336 = vmatpush1.msra.mxu0 0.0
    %337 = vmatprep.subr.mxu0 0.0
    %338 = vmatpush1.msra.mxu0 0.0
    %339 = vmatprep.subr.mxu0 0.0
    %340 = vmatpush1.msra.mxu0 0.0
    %341 = vmatprep.subr.mxu0 0.0
    %342 = vmatpush1.msra.mxu0 0.0
    %343 = vmatprep.subr.mxu0 0.0
    %344 = vmatpush1.msra.mxu0 0.0
    %345 = vmatprep.subr.mxu0 0.0
    %346 = vmatpush1.msra.mxu0 0.0
    %347 = vmatprep.subr.mxu0 0.0
    %348 = vmatpush1.msra.mxu0 0.0
    %349 = vmatprep.subr.mxu0 0.0
    %350 = vmatpush1.msra.mxu0 0.0
    %351 = vmatprep.subr.mxu0 0.0
    %352 = vmatpush1.msra.mxu0 0.0
    %353 = vmatprep.subr.mxu0 0.0
    %354 = vmatpush1.msra.mxu0 0.0
    %355 = vmatprep.subr.mxu0 0.0
    %356 = vmatpush1.msra.mxu0 0.0
    %357 = vmatprep.subr.mxu0 0.0
    %358 = vmatpush1.msra.mxu0 0.0
    %359 = vmatprep.subr.mxu0 0.0
    %360 = vmatpush1.msra.mxu0 0.0
    %361 = vmatprep.subr.mxu0 0.0
    %362 = vmatpush1.msra.mxu0 0.0
    %363 = vmatprep.subr.mxu0 0.0
    %v364 = vand.u32 %v31, 4294901760
    %v365 = vsub.f32 %v31, %v364
    %v366 = vand.u32 %v365, 4294901760
    %367 = vmatpush1.msra.mxu0 %v366
    %368 = vmatprep.subr.mxu0 0.0
    %369 = vmatpush2.msra.mxu0 0.0
    %370 = vmatprep.subr.mxu0 0.0
    %371 = vmatpush2.msra.mxu0 0.0
    %372 = vmatprep.subr.mxu0 0.0
    %373 = vmatpush2.msra.mxu0 0.0
    %374 = vmatprep.subr.mxu0 0.0
    %375 = vmatpush2.msra.mxu0 0.0
    %376 = vmatprep.subr.mxu0 0.0
    %377 = vmatpush2.msra.mxu0 0.0
    %378 = vmatprep.subr.mxu0 0.0
    %379 = vmatpush2.msra.mxu0 0.0
    %380 = vmatprep.subr.mxu0 0.0
    %381 = vmatpush2.msra.mxu0 0.0
    %382 = vmatprep.subr.mxu0 0.0
    %383 = vmatpush2.msra.mxu0 0.0
    %384 = vmatprep.subr.mxu0 0.0
    %385 = vmatpush2.msra.mxu0 0.0
    %386 = vmatprep.subr.mxu0 0.0
    %387 = vmatpush2.msra.mxu0 0.0
    %388 = vmatprep.subr.mxu0 0.0
    %389 = vmatpush2.msra.mxu0 0.0
    %390 = vmatprep.subr.mxu0 0.0
    %391 = vmatpush2.msra.mxu0 0.0
    %392 = vmatprep.subr.mxu0 0.0
    %393 = vmatpush2.msra.mxu0 0.0
    %394 = vmatprep.subr.mxu0 0.0
    %395 = vmatpush2.msra.mxu0 0.0
    %396 = vmatprep.subr.mxu0 0.0
    %397 = vmatpush2.msra.mxu0 0.0
    %398 = vmatprep.subr.mxu0 0.0
    %399 = vmatpush2.msra.mxu0 0.0
    %400 = vmatprep.mubr.f32.mxu0 0.0
    %v401 = vand.u32 %v27, 4294901760
    %402 = vmatmul.mubr.f32.gmra.mxu0 %v401
    %v403 = vpop.f32.mrf.mxu0
    %v404 = vadd.f32 %v330, %v403
    %v405 = vpop.f32.mrf.mxu0
    %406 = vdwg.mxu0
    %407 = vmatprep.subr.mxu0 0.0
    %408 = vmatpush1.msra.mxu0 0.0
    %409 = vmatprep.subr.mxu0 0.0
    %410 = vmatpush1.msra.mxu0 0.0
    %411 = vmatprep.subr.mxu0 0.0
    %412 = vmatpush1.msra.mxu0 0.0
    %413 = vmatprep.subr.mxu0 0.0
    %414 = vmatpush1.msra.mxu0 0.0
    %415 = vmatprep.subr.mxu0 0.0
    %416 = vmatpush1.msra.mxu0 0.0
    %417 = vmatprep.subr.mxu0 0.0
    %418 = vmatpush1.msra.mxu0 0.0
    %419 = vmatprep.subr.mxu0 0.0
    %420 = vmatpush1.msra.mxu0 0.0
    %421 = vmatprep.subr.mxu0 0.0
    %422 = vmatpush1.msra.mxu0 0.0
    %423 = vmatprep.subr.mxu0 0.0
    %424 = vmatpush1.msra.mxu0 0.0
    %425 = vmatprep.subr.mxu0 0.0
    %426 = vmatpush1.msra.mxu0 0.0
    %427 = vmatprep.subr.mxu0 0.0
    %428 = vmatpush1.msra.mxu0 0.0
    %429 = vmatprep.subr.mxu0 0.0
    %430 = vmatpush1.msra.mxu0 0.0
    %431 = vmatprep.subr.mxu0 0.0
    %432 = vmatpush1.msra.mxu0 0.0
    %433 = vmatprep.subr.mxu0 0.0
    %434 = vmatpush1.msra.mxu0 0.0
    %435 = vmatprep.subr.mxu0 0.0
    %436 = vmatpush1.msra.mxu0 0.0
    %437 = vmatprep.subr.mxu0 0.0
    %v438 = vand.u32 %v31, 4294901760
    %439 = vmatpush1.msra.mxu0 %v438
    %440 = vmatprep.subr.mxu0 0.0
    %441 = vmatpush2.msra.mxu0 0.0
    %442 = vmatprep.subr.mxu0 0.0
    %443 = vmatpush2.msra.mxu0 0.0
    %444 = vmatprep.subr.mxu0 0.0
    %445 = vmatpush2.msra.mxu0 0.0
    %446 = vmatprep.subr.mxu0 0.0
    %447 = vmatpush2.msra.mxu0 0.0
    %448 = vmatprep.subr.mxu0 0.0
    %449 = vmatpush2.msra.mxu0 0.0
    %450 = vmatprep.subr.mxu0 0.0
    %451 = vmatpush2.msra.mxu0 0.0
    %452 = vmatprep.subr.mxu0 0.0
    %453 = vmatpush2.msra.mxu0 0.0
    %454 = vmatprep.subr.mxu0 0.0
    %455 = vmatpush2.msra.mxu0 0.0
    %456 = vmatprep.subr.mxu0 0.0
    %457 = vmatpush2.msra.mxu0 0.0
    %458 = vmatprep.subr.mxu0 0.0
    %459 = vmatpush2.msra.mxu0 0.0
    %460 = vmatprep.subr.mxu0 0.0
    %461 = vmatpush2.msra.mxu0 0.0
    %462 = vmatprep.subr.mxu0 0.0
    %463 = vmatpush2.msra.mxu0 0.0
    %464 = vmatprep.subr.mxu0 0.0
    %465 = vmatpush2.msra.mxu0 0.0
    %466 = vmatprep.subr.mxu0 0.0
    %467 = vmatpush2.msra.mxu0 0.0
    %468 = vmatprep.subr.mxu0 0.0
    %469 = vmatpush2.msra.mxu0 0.0
    %470 = vmatprep.subr.mxu0 0.0
    %471 = vmatpush2.msra.mxu0 0.0
    %472 = vmatprep.mubr.f32.mxu0 0.0
    %v473 = vand.u32 %v27, 4294901760
    %474 = vmatmul.mubr.f32.gmra.mxu0 %v473
    %v475 = vpop.f32.mrf.mxu0
    %v476 = vadd.f32 %v404, %v475
    %v477 = vpop.f32.mrf.mxu0
    %478 = vdwg.mxu0
    %v479 = vand.u32 2147483647, %v476
    %vm480 = vcmp.le.f32.partialorder %v479, 0.7853982
    %vm481 = vcmp.lt.s32.totalorder %v476, 0
    %v482 = vand.u32 %v476, 2139095040
    %v483 = vshrl.u32 %v482, 23
    %v484 = vsub.s32 %v483, 127
    %v485 = vand.u32 2147483647, %v476
    %v486 = vand.u32 %v485, 8388607
    %v487 = vor.u32 %v486, 8388608
    %v488 = vsub.s32 0, %v487
    %v489 = vadd.s32 %v484, 1
    %vm490 = vcmp.gt.s32.totalorder %v489, 0
    %v491 = vsel %vm490, %v489, 0
    %v492 = vshrl.u32 %v491, 5
    %v493 = vand.u32 %v491, 31
    %v494 = vsub.s32 32, %v493
    %v495 = vshrl.u32 683565275, %v494
    %v496 = vshll.u32 683565275, %v493
    %v497 = vshrl.u32 2475754826, %v494
    %v498 = vor.u32 %v496, %v497
    %v499 = vshll.u32 2475754826, %v493
    %v500 = vshrl.u32 2131351028, %v494
    %v501 = vor.u32 %v499, %v500
    %v502 = vshll.u32 2131351028, %v493
    %v503 = vshrl.u32 2102212464, %v494
    %v504 = vor.u32 %v502, %v503
    %v505 = vshll.u32 2102212464, %v493
    %v506 = vshrl.u32 920167782, %v494
    %v507 = vor.u32 %v505, %v506
    %v508 = vshll.u32 920167782, %v493
    %v509 = vshrl.u32 1326507024, %v494
    %v510 = vor.u32 %v508, %v509
    %vm511 = vcmp.lt.s32.totalorder %v492, 1
    %vm512 = vcmp.lt.s32.totalorder %v492, 2
    %vm513 = vcmp.lt.s32.totalorder %v492, 3
    %vm514 = vcmp.lt.s32.totalorder %v492, 4
    %v515 = vsel %vm511, %v495, %v498
    %v516 = vsel %vm514, %v504, 2102212464
    %v517 = vsel %vm513, %v501, %v516
    %v518 = vsel %vm512, %v515, %v517
    %v519 = vsel %vm511, %v498, %v501
    %v520 = vsel %vm514, %v507, 920167782
    %v521 = vsel %vm513, %v504, %v520
    %v522 = vsel %vm512, %v519, %v521
    %v523 = vsel %vm511, %v501, %v504
    %v524 = vsel %vm514, %v510, 1326507024
    %v525 = vsel %vm513, %v507, %v524
    %v526 = vsel %vm512, %v523, %v525
    %v527 = vshll.u32 %v487, 8
    %v528 = vmul.u32.u64.compose %v527, %v526
    %v529 = vextract.low.u32 %v528
    %v530 = vextract.high.u32 %v528
    %v531 = vmul.u32.u64.compose %v527, %v522
    %v532 = vextract.low.u32 %v531
    %v533 = vextract.high.u32 %v531
    %v534 = vmul.u32 %v527, %v518
    %v535 = vadd.s32 %v530, %v532
    %vm536 = vc.u32 %v530, %v532
    %v537 = vadd.s32 %v533, 1
    %v538 = vsel %vm536, %v537, %v533
    %v539 = vadd.s32 %v534, %v538
    %v540 = vadd.s32 %v539, 536870912
    %v541 = vshrl.u32 %v540, 30
    %v542 = vshll.u32 %v541, 30
    %v543 = vsub.s32 %v539, %v542
    %vm544 = vcmp.lt.s32.totalorder %v543, 0
    %v545 = vsub.s32 0, %v543
    %v546 = vsel %vm544, %v545, %v543
    %v547 = vclz %v546
    %v548 = vsub.s32 %v547, 2
    %vm549 = vcmp.gt.s32.totalorder 0, %v548
    %v550 = vsel %vm549, 0, %v548
    %v551 = vsub.s32 32, %v550
    %v552 = vshll.u32 %v543, %v550
    %v553 = vshrl.u32 %v535, %v551
    %v554 = vor.u32 %v552, %v553
    %v555 = vsub.s32 4294967266, %v550
    %v556 = vadd.s32 %v555, 127
    %v557 = vshll.u32 %v556, 23
    %v558 = vor.u32 4788187, %v557
    %v559 = vand.u32 2147483647, %v558
    %v561 = vcvt.s32.f32 %v554
    %v562 = vmul.f32 %v561, %v559
    %v563 = vxor.u32 %v562, 2147483648
    %v564 = vsel %vm481, %v563, %v562
    %v565 = vsub.s32 4, %v541
    %v566 = vsel %vm481, %v565, %v541
    %v567 = vsel %vm480, %v476, %v564
    %v568 = vsel %vm480, 0, %v566
    %v569 = vcosq.f32.pop %v567
    %v570 = vsinq.f32.pop %v567
    %vm571 = vweird.f32 %v476
    %v572 = vadd.s32 %v568, 3
    %v573 = vand.u32 %v572, 3
    %vm574 = vcmp.lt.s32.totalorder %v573, 2
    %vm575 = vcmp.eq.s32.totalorder %v573, 0
    %v576 = vxor.u32 %v570, 2147483648
    %v577 = vsel %vm575, %v569, %v576
    %vm578 = vcmp.eq.s32.totalorder %v573, 2
    %v579 = vxor.u32 %v569, 2147483648
    %v580 = vsel %vm578, %v579, %v570
    %v581 = vsel %vm574, %v577, %v580
    %v582 = vsel %vm571, nan, %v581
    %583 = vst [vmem:[#allocation2] sm:$0xff] %v582
    // Predicated region
    $region14: #{tpu_custom_call.1} parent=1 // pred_check
      _
    $region15: #{tpu_custom_call.1} parent=1 // pred_check_branch
      %585 = sbr.rel (0) target = $region17
    $region16: #{tpu_custom_call.1} parent=1 // pred_region
      %s587 = ssub.s32 128, 128
      %588 = vsyncadd [#allocation3], %s587
      %s590 = sshll.u32 [#allocation2], 4
      %s591 = int_to_ptr.vmem [resolvable:$true] %s590
      %593 = dma.vmem_to_hbm [thread:$0]  %s591, 128, %s3, [#allocation3]
    $region17: #{tpu_custom_call.1} parent=1 // pred_fallthru
      _
    // Predicated region
    $region18: #{tpu_custom_call.1} parent=1 // pred_check
      _
    $region19: #{tpu_custom_call.1} parent=1 // pred_check_branch
      %595 = sbr.rel (0) target = $region21
    $region20: #{tpu_custom_call.1} parent=1 // pred_region
      %596 = dma.done [#allocation3], 128
    $region21: #{tpu_custom_call.1} parent=1 // pred_fallthru
      _
    %597 = vsyncpa [#allocation3], 1

</llo_original>
